<compile_context>
chip_gen: v5e
topology: v5e:2x2
jax: 0.10.0
libtpu: 0.0.40
codegen_flags: <defaults>
</compile_context>

<pallas_src>
import jax
import jax.numpy as jnp
from jax.experimental import pallas as pl
from jax.experimental.pallas import tpu as pltpu


def _round_up(x, m):
    return ((x + m - 1) // m) * m


def _mvn_forward_kernel(z_ref, lt_ref, m_ref, o_ref):
    # z_ref : (tm, n_z)    one batch tile of sampled rvs
    # lt_ref: (n_z, n_z)   L.T, VMEM-resident across grid steps
    # m_ref : (1, n_z)     mean, VMEM-resident across grid steps
    # o_ref : (tm, n_z)
    acc = jnp.dot(z_ref[...], lt_ref[...], preferred_element_type=jnp.float32)
    o_ref[...] = (acc + m_ref[...].astype(jnp.float32)).astype(o_ref.dtype)


def reparameterized_mvn_forward(z, L, m, *, tile_m=4096):
    """forward(z) = m + z @ L.T, batch-tiled Pallas kernel (no padding passes)."""
    N, n_z = z.shape
    assert L.shape == (n_z, n_z)
    assert m.shape == (1, n_z)
    out_dtype = z.dtype

    # One-off transpose in the wrapper so the MXU sees a plain (M,K)@(K,N).
    lt = L.T

    # Sublane alignment for non-full blocks: 8 rows for 4-byte, 16 for 2-byte.
    align = 8 if jnp.dtype(out_dtype).itemsize >= 4 else 16

    # Sanitize the row tile to a multiple of the alignment.
    tm = max(align, (int(tile_m) // align) * align)

    if N <= tm:
        if N >= 2048:
            # Large single-tile case: split into 2 parallel steps so v7x's
            # second TensorCore gets half the batch.
            tm = _round_up(-(-N // 2), align)
        else:
            # Full-array block: legal even when N is not a multiple of 8.
            tm = N
    grid = (pl.cdiv(N, tm),)

    itemsize = jnp.dtype(out_dtype).itemsize
    cost = pl.CostEstimate(
        flops=2 * N * n_z * n_z,
        transcendentals=0,
        bytes_accessed=itemsize * 2 * N * n_z
        + jnp.dtype(L.dtype).itemsize * n_z * n_z
        + jnp.dtype(m.dtype).itemsize * n_z,
    )

    return pl.pallas_call(
        _mvn_forward_kernel,
        out_shape=jax.ShapeDtypeStruct((N, n_z), out_dtype),
        grid=grid,
        in_specs=[
            pl.BlockSpec((tm, n_z), lambda i: (i, 0)),    # z tile
            pl.BlockSpec((n_z, n_z), lambda i: (0, 0)),   # L.T (resident)
            pl.BlockSpec((1, n_z), lambda i: (0, 0)),     # m   (resident)
        ],
        out_specs=pl.BlockSpec((tm, n_z), lambda i: (i, 0)),
        compiler_params=pltpu.CompilerParams(
            dimension_semantics=("parallel",),
        ),
        cost_estimate=cost,
    )(z, lt, m)


if __name__ == "__main__":
    n_z = 32   # latent dim (module's n_z)
    N = 8      # batch of sampled rvs

    key = jax.random.PRNGKey(0)
    k_m, k_z, k_l, k_z2 = jax.random.split(key, 4)

    # Deterministic parameter init mirroring __init__:
    #   self.m = Parameter(torch.randn((1, n_z)))
    #   self.L = Parameter(torch.eye(n_z))
    m = jax.random.normal(k_m, (1, n_z), dtype=jnp.float32)
    L = jnp.eye(n_z, dtype=jnp.float32)
    # Perturb L slightly so the transpose path is actually exercised.
    L = L + 0.01 * jax.random.normal(k_l, (n_z, n_z), dtype=jnp.float32)

    z = jax.random.normal(k_z, (N, n_z), dtype=jnp.float32)

    out = jax.block_until_ready(reparameterized_mvn_forward(z, L, m))
    ref = m + z @ L.T
    assert out.shape == (N, n_z)
    assert jnp.allclose(out, ref, atol=1e-5, rtol=1e-5)

    # Multi-tile grid with a masked partial trailing block: 300 = 2*128 + 44,
    # no wrapper-side row padding.
    N2 = 300
    z2 = jax.random.normal(k_z2, (N2, n_z), dtype=jnp.float32)
    out2 = jax.block_until_ready(
        reparameterized_mvn_forward(z2, L, m, tile_m=128))
    ref2 = m + z2 @ L.T
    assert out2.shape == (N2, n_z)
    assert jnp.allclose(out2, ref2, atol=1e-5, rtol=1e-5)

    print("KERNEL_OK")
</pallas_src>

<mosaic_0001>
module attributes {stable_mosaic.version = 11 : i64} {
  func.func @_mvn_forward_kernel(%arg0: i32, %arg1: memref<8x32xf32, #tpu.memory_space<vmem>>, %arg2: memref<32x32xf32, #tpu.memory_space<vmem>>, %arg3: memref<1x32xf32, #tpu.memory_space<vmem>>, %arg4: memref<8x32xf32, #tpu.memory_space<vmem>>) attributes {dimension_semantics = [#tpu.dimension_semantics<parallel>], iteration_bounds = array<i64: 1>, scalar_prefetch = 0 : i64, scratch_operands = 0 : i64, tpu.core_type = #tpu.core_type<tc>, window_params = [{transform_indices = @transform_0, window_bounds = array<i64: 8, 32>}, {pipeline_mode = #tpu.pipeline_mode<synchronous>, transform_indices = @transform_1, window_bounds = array<i64: 32, 32>}, {pipeline_mode = #tpu.pipeline_mode<synchronous>, transform_indices = @transform_2, window_bounds = array<i64: 1, 32>}, {transform_indices = @transform_3, window_bounds = array<i64: 8, 32>}]} {
    %c0 = arith.constant 0 : index
    %c0_0 = arith.constant 0 : index
    %0 = vector.load %arg1[%c0, %c0_0] : memref<8x32xf32, #tpu.memory_space<vmem>>, vector<8x32xf32>
    %c0_1 = arith.constant 0 : index
    %c0_2 = arith.constant 0 : index
    %1 = vector.load %arg2[%c0_1, %c0_2] : memref<32x32xf32, #tpu.memory_space<vmem>>, vector<32x32xf32>
    %cst = arith.constant dense<0.000000e+00> : vector<8x32xf32>
    %2 = tpu.matmul %0, %1, %cst {dimension_numbers = #tpu.dot_dimension_numbers<[1], [0], [0], [1], [0, 0, 1, 1], [], []>} : vector<8x32xf32>, vector<32x32xf32>, vector<8x32xf32> -> vector<8x32xf32>
    %c0_3 = arith.constant 0 : index
    %c0_4 = arith.constant 0 : index
    %3 = vector.load %arg3[%c0_3, %c0_4] : memref<1x32xf32, #tpu.memory_space<vmem>>, vector<1x32xf32>
    %4 = vector.broadcast %3 : vector<1x32xf32> to vector<8x32xf32>
    %5 = arith.addf %2, %4 : vector<8x32xf32>
    %c0_5 = arith.constant 0 : index
    %c0_6 = arith.constant 0 : index
    %6 = vector.load %arg4[%c0_5, %c0_6] : memref<8x32xf32, #tpu.memory_space<vmem>>, vector<8x32xf32>
    tpu.vector_store %arg4[%c0_5, %c0_6], %5 {strides = array<i32>} : memref<8x32xf32, #tpu.memory_space<vmem>>, vector<8x32xf32>,
    return
  }
  func.func @transform_0(%arg0: i32) -> (i32, i32) {
    %c0_i32 = arith.constant 0 : i32
    %c0_i32_0 = arith.constant 0 : i32
    return %arg0, %c0_i32 : i32, i32
  }
  func.func @transform_1(%arg0: i32) -> (i32, i32) {
    %c0_i32 = arith.constant 0 : i32
    %c0_i32_0 = arith.constant 0 : i32
    %c0_i32_1 = arith.constant 0 : i32
    return %c0_i32, %c0_i32_0 : i32, i32
  }
  func.func @transform_2(%arg0: i32) -> (i32, i32) {
    %c0_i32 = arith.constant 0 : i32
    %c0_i32_0 = arith.constant 0 : i32
    %c0_i32_1 = arith.constant 0 : i32
    return %c0_i32, %c0_i32_0 : i32, i32
  }
  func.func @transform_3(%arg0: i32) -> (i32, i32) {
    %c0_i32 = arith.constant 0 : i32
    %c0_i32_0 = arith.constant 0 : i32
    return %arg0, %c0_i32 : i32, i32
  }
}

</mosaic_0001>

<llo_original>
// kernel: tpu_custom_call.1
$region0: #{tpu_custom_call.1}
  #allocation0 [shape = 'u32[]', space=smem, size = 0x4, offset = 0x4, fixed_abs, tag = 'smem constant byte address 0x4 - core index']
  #allocation1 [shape = 'u32[72,128]{1,0:T(1,128)}', space=vmem, size = 0x9000, scoped, tag = 'internal scratch']
  %s0 = inlined_call_operand.hbm [shape: f32[8,32], index: 0, kind: input, shape index: {}]
  %s1 = inlined_call_operand.hbm [shape: f32[32,32], index: 1, kind: input, shape index: {}]
  %s2 = inlined_call_operand.vmem [shape: f32[1,32], index: 2, kind: input, shape index: {}]
  %s3 = inlined_call_operand.hbm [shape: f32[8,32], index: 3, kind: output, shape index: {}]
  %s4 = sld [smem:[#allocation0]]
  $region30: #{tpu_custom_call.1} parent=0
    _
  %s6 = ssub.s32 1, %s4
  %s7 = scalar_select 0, %s6, %s4
  $region1: #{tpu_custom_call.1} parent=0
    #allocation2 [shape = 'u8[4096]{0}', space=vmem, size = 0x1000, scoped, tag = 'input window, operand 0, single buffered']
    #allocation3 [shape = 's32[1]{0}', space=sflag, size = 0x4, scoped, tag = 'scoped memory for tpu_custom_call.1']
    #allocation4 [shape = 's32[1]{0}', space=sflag, size = 0x4, scoped, tag = 'scoped memory for tpu_custom_call.1']
    #allocation5 [shape = 'u8[16384]{0}', space=vmem, size = 0x4000, scoped, tag = 'input window, operand 1, single buffered']
    #allocation6 [shape = 's32[1]{0}', space=sflag, size = 0x4, scoped, tag = 'scoped memory for tpu_custom_call.1']
    #allocation7 [shape = 'u8[4096]{0}', space=vmem, size = 0x1000, scoped, tag = 'output window, operand 0, single buffered']
    %8 = vsyncpa [#allocation3], 0
    %9 = vsyncpa [#allocation6], 0
    %10 = vsyncpa [#allocation4], 0
    // Predicated region
    $region2: #{tpu_custom_call.1} parent=1 // pred_check
      _
    $region3: #{tpu_custom_call.1} parent=1 // pred_check_branch
      %12 = sbr.rel (0) target = $region5
    $region4: #{tpu_custom_call.1} parent=1 // pred_region
      %14 = vsyncadd [#allocation3], 0
      %s16 = sshll.u32 %s0, 4
      %s17 = int_to_ptr.hbm [resolvable:$true] %s16
      %s18 = sshll.u32 [#allocation2], 4
      %s19 = int_to_ptr.vmem [resolvable:$true] %s18
      %21 = dma.hbm_to_vmem [thread:$0]  %s17, 128, %s19, [#allocation3]
    $region5: #{tpu_custom_call.1} parent=1 // pred_fallthru
      _
    // Predicated region
    $region6: #{tpu_custom_call.1} parent=1 // pred_check
      _
    $region7: #{tpu_custom_call.1} parent=1 // pred_check_branch
      %23 = sbr.rel (0) target = $region9
    $region8: #{tpu_custom_call.1} parent=1 // pred_region
      %25 = vsyncadd [#allocation6], 0
      %s26 = sshll.u32 %s1, 4
      %s27 = int_to_ptr.hbm [resolvable:$true] %s26
      %s28 = sshll.u32 [#allocation5], 4
      %s29 = int_to_ptr.vmem [resolvable:$true] %s28
      %34 = dma.hbm_to_vmem [thread:$0]  %s27, 512, %s29, [#allocation6], 128, 128, 8
    $region9: #{tpu_custom_call.1} parent=1 // pred_fallthru
      _
    // Predicated region
    $region10: #{tpu_custom_call.1} parent=1 // pred_check
      _
    $region11: #{tpu_custom_call.1} parent=1 // pred_check_branch
      %36 = sbr.rel (0) target = $region13
    $region12: #{tpu_custom_call.1} parent=1 // pred_region
      _
    $region13: #{tpu_custom_call.1} parent=1 // pred_fallthru
      _
    // Predicated region
    $region14: #{tpu_custom_call.1} parent=1 // pred_check
      _
    $region15: #{tpu_custom_call.1} parent=1 // pred_check_branch
      %38 = sbr.rel (0) target = $region17
    $region16: #{tpu_custom_call.1} parent=1 // pred_region
      %40 = dma.done [#allocation3], 128
    $region17: #{tpu_custom_call.1} parent=1 // pred_fallthru
      _
    // Predicated region
    $region18: #{tpu_custom_call.1} parent=1 // pred_check
      _
    $region19: #{tpu_custom_call.1} parent=1 // pred_check_branch
      %42 = sbr.rel (0) target = $region21
    $region20: #{tpu_custom_call.1} parent=1 // pred_region
      %44 = dma.done [#allocation6], 512
    $region21: #{tpu_custom_call.1} parent=1 // pred_fallthru
      _
    %v45 = vld [vmem:[#allocation2] sm:$0xff]
    %v46 = vld [vmem:[#allocation5] sm:$0xff]
    %v47 = vld [vmem:[#allocation5 + $0x8] sm:$0xff]
    %v48 = vld [vmem:[#allocation5 + $0x10] sm:$0xff]
    %v49 = vld [vmem:[#allocation5 + $0x18] sm:$0xff]
    %v50 = vld [vmem:[%s2] sm:$0x1]
    %v52 = vperm.slane %v50, 0
    %vm54 = vcmask 261120
    %v56 = vsel %vm54, %v45, 0
    %58 = vmatpush.msra.mxu0 0.0
    %59 = vmatpush.msra.mxu0 0.0
    %60 = vmatpush.msra.mxu0 0.0
    %61 = vmatpush.msra.mxu0 0.0
    %62 = vmatpush.msra.mxu0 0.0
    %63 = vmatpush.msra.mxu0 0.0
    %64 = vmatpush.msra.mxu0 0.0
    %65 = vmatpush.msra.mxu0 0.0
    %66 = vmatpush.msra.mxu0 0.0
    %67 = vmatpush.msra.mxu0 0.0
    %68 = vmatpush.msra.mxu0 0.0
    %69 = vmatpush.msra.mxu0 0.0
    %70 = vmatpush.msra.mxu0 %v49
    %71 = vmatpush.msra.mxu0 %v48
    %72 = vmatpush.msra.mxu0 %v47
    %73 = vmatpush.msra.mxu0 %v46
    %74 = vmatmul.f32.gmra.mxu0 %v56
    %v75 = vpop.f32.mrf.mxu0
    %v76 = vadd.f32 %v52, %v75
    %77 = vdwg.mxu0
    %78 = vst.msk [vmem:[#allocation7] sm:$0xff] %vm54, %v76
    // Predicated region
    $region22: #{tpu_custom_call.1} parent=1 // pred_check
      _
    $region23: #{tpu_custom_call.1} parent=1 // pred_check_branch
      %80 = sbr.rel (0) target = $region25
    $region24: #{tpu_custom_call.1} parent=1 // pred_region
      %82 = vsyncadd [#allocation4], 0
      %s84 = sshll.u32 [#allocation7], 4
      %s85 = int_to_ptr.vmem [resolvable:$true] %s84
      %s86 = sshll.u32 %s3, 4
      %s87 = int_to_ptr.hbm [resolvable:$true] %s86
      %89 = dma.vmem_to_hbm [thread:$0]  %s85, 128, %s87, [#allocation4]
    $region25: #{tpu_custom_call.1} parent=1 // pred_fallthru
      _
    // Predicated region
    $region26: #{tpu_custom_call.1} parent=1 // pred_check
      _
    $region27: #{tpu_custom_call.1} parent=1 // pred_check_branch
      %91 = sbr.rel (0) target = $region29
    $region28: #{tpu_custom_call.1} parent=1 // pred_region
      %93 = dma.done [#allocation4], 128
    $region29: #{tpu_custom_call.1} parent=1 // pred_fallthru
      _
    %94 = vsyncpa [#allocation3], 1
    %95 = vsyncpa [#allocation6], 1
    %96 = vsyncpa [#allocation4], 1

</llo_original>
